<compile_context>
chip_gen: v5e
topology: v5e:2x2
jax: 0.10.0
libtpu: 0.0.40
codegen_flags: <defaults>
</compile_context>

<pallas_src>
import jax
import jax.numpy as jnp
from jax.experimental import pallas as pl
from jax.experimental.pallas import tpu as pltpu


def _round_up(v, m):
    return ((v + m - 1) // m) * m


def simplenet_kernel(x_ref, w1_ref, b1_ref, w2_ref, b2_ref, o_ref):
    # fc1: x @ W1 + b1, then ReLU (f32 accumulation on the MXU).
    h = jnp.dot(x_ref[...], w1_ref[...], preferred_element_type=jnp.float32)
    h = jnp.maximum(h + b1_ref[...], 0.0)
    # fc2: h @ W2 + b2 (narrow N; store is masked but DMA-cheap).
    out = jnp.dot(h, w2_ref[...], preferred_element_type=jnp.float32)
    o_ref[...] = (out + b2_ref[...]).astype(o_ref.dtype)


def prepare_simplenet_params(w1, b1, w2, b2, *, lane=128):
    """One-time padding of parameters (hoisted out of the per-call forward).

    w1: [in_c, hidden], b1: [1, hidden] (or [hidden]),
    w2: [hidden, num_classes], b2: [1, num_classes] (or [num_classes]).
    Only the hidden axis is padded to a lane-dense 128; num_classes stays
    unpadded so the HBM output path carries no zero padding.
    """
    in_c, hidden = w1.shape
    num_classes = w2.shape[1]
    hid_p = _round_up(hidden, lane)

    b1 = jnp.reshape(b1, (1, hidden))
    b2 = jnp.reshape(b2, (1, num_classes))

    w1_p = jnp.zeros((in_c, hid_p), w1.dtype).at[:, :hidden].set(w1)
    b1_p = jnp.zeros((1, hid_p), b1.dtype).at[:, :hidden].set(b1)
    w2_p = jnp.zeros((hid_p, num_classes), w2.dtype).at[:hidden, :].set(w2)
    b2_p = b2
    return w1_p, b1_p, w2_p, b2_p


def simplenet_forward(x, w1_p, b1_p, w2_p, b2_p, *, block_b=8192):
    """x: [B, in_c]; padded params from prepare_simplenet_params().
    Returns [B, num_classes]."""
    B, in_c = x.shape
    hid_p = w1_p.shape[1]
    num_classes = w2_p.shape[1]
    dtype = x.dtype
    itemsize = jnp.dtype(dtype).itemsize

    LANE = 128
    SUBLANE = 8

    # Pad the batch only to the f32 sublane multiple (cheap; skipped entirely
    # when B % 8 == 0, which is the common case).
    B_p = _round_up(B, SUBLANE)
    x_in = x if B_p == B else jnp.pad(x, ((0, B_p - B), (0, 0)))

    # Batch tile: as large as the VMEM budget allows (double-buffered x + out
    # blocks are lane-padded to 128 in VMEM), capped at block_b and B_p.
    VMEM_BUDGET = 32 << 20  # budget for the streaming buffers
    per_row_vmem = 2 * (_round_up(in_c, LANE) + _round_up(num_classes, LANE)) * itemsize
    max_tb = max(SUBLANE, (VMEM_BUDGET // per_row_vmem) // SUBLANE * SUBLANE)
    TB = min(_round_up(block_b, SUBLANE), B_p, max_tb)

    grid = (pl.cdiv(B_p, TB),)  # ragged last tile handled by Pallas clipping

    # Raise the scoped VMEM limit to cover the streaming buffers + resident
    # weights, with headroom; stay well under v7x's 64 MiB physical VMEM.
    vmem_needed = per_row_vmem * TB + (4 << 20)
    vmem_limit = int(min(max(vmem_needed, 16 << 20), 56 << 20))

    flops = 2 * B_p * (in_c * hid_p + hid_p * num_classes)
    bytes_accessed = itemsize * (
        B_p * in_c + B_p * num_classes
        + in_c * hid_p + hid_p + hid_p * num_classes + num_classes)

    out = pl.pallas_call(
        simplenet_kernel,
        out_shape=jax.ShapeDtypeStruct((B_p, num_classes), dtype),
        grid=grid,
        in_specs=[
            # Streamed per batch tile.
            pl.BlockSpec((TB, in_c), lambda i: (i, 0)),
            # Resident in VMEM across all tiles (constant block index).
            pl.BlockSpec((in_c, hid_p), lambda i: (0, 0)),
            pl.BlockSpec((1, hid_p), lambda i: (0, 0)),
            pl.BlockSpec((hid_p, num_classes), lambda i: (0, 0)),
            pl.BlockSpec((1, num_classes), lambda i: (0, 0)),
        ],
        # Narrow, unpadded output block (block dim == full array dim is legal).
        out_specs=pl.BlockSpec((TB, num_classes), lambda i: (i, 0)),
        compiler_params=pltpu.CompilerParams(
            dimension_semantics=("parallel",),  # megacore-shard batch on v7x
            vmem_limit_bytes=vmem_limit,
        ),
        cost_estimate=pl.CostEstimate(
            flops=flops, transcendentals=0, bytes_accessed=bytes_accessed),
    )(x_in, w1_p, b1_p, w2_p, b2_p)

    return out if B_p == B else out[:B]


def init_linear_params(key, in_features, out_features, dtype=jnp.float32):
    """PyTorch-style nn.Linear init: U(-1/sqrt(fan_in), 1/sqrt(fan_in)).
    Weight returned as [in_features, out_features] (transposed vs torch)."""
    kw, kb = jax.random.split(key)
    bound = 1.0 / (in_features ** 0.5)
    w = jax.random.uniform(kw, (in_features, out_features), dtype,
                           minval=-bound, maxval=bound)
    b = jax.random.uniform(kb, (1, out_features), dtype,
                           minval=-bound, maxval=bound)
    return w, b


if __name__ == "__main__":
    # Small shapes consistent with SimpleNet: flat feature input.
    batch = 8
    in_channel = 32
    hidden = 10          # fixed by SimpleNet (fc1 out_features=10)
    num_classes = 10

    key = jax.random.PRNGKey(0)
    kx, k1, k2 = jax.random.split(key, 3)

    x = jax.random.normal(kx, (batch, in_channel), jnp.float32)
    w1, b1 = init_linear_params(k1, in_channel, hidden)
    w2, b2 = init_linear_params(k2, hidden, num_classes)

    # One-time parameter padding (hoisted out of the forward).
    params = prepare_simplenet_params(w1, b1, w2, b2)

    out = simplenet_forward(x, *params)
    out = jax.block_until_ready(out)

    # Pure-JAX reference check.
    ref = jnp.maximum(x @ w1 + b1, 0.0) @ w2 + b2
    assert out.shape == (batch, num_classes)
    assert jnp.allclose(out, ref, atol=1e-5, rtol=1e-5)

    print("KERNEL_OK")
</pallas_src>

<mosaic_0001>
module attributes {stable_mosaic.version = 11 : i64} {
  func.func @simplenet_kernel(%arg0: i32, %arg1: memref<8x32xf32, #tpu.memory_space<vmem>>, %arg2: memref<32x128xf32, #tpu.memory_space<vmem>>, %arg3: memref<1x128xf32, #tpu.memory_space<vmem>>, %arg4: memref<128x10xf32, #tpu.memory_space<vmem>>, %arg5: memref<1x10xf32, #tpu.memory_space<vmem>>, %arg6: memref<8x10xf32, #tpu.memory_space<vmem>>) attributes {dimension_semantics = [#tpu.dimension_semantics<parallel>], iteration_bounds = array<i64: 1>, scalar_prefetch = 0 : i64, scratch_operands = 0 : i64, tpu.core_type = #tpu.core_type<tc>, window_params = [{transform_indices = @transform_0, window_bounds = array<i64: 8, 32>}, {pipeline_mode = #tpu.pipeline_mode<synchronous>, transform_indices = @transform_1, window_bounds = array<i64: 32, 128>}, {pipeline_mode = #tpu.pipeline_mode<synchronous>, transform_indices = @transform_2, window_bounds = array<i64: 1, 128>}, {pipeline_mode = #tpu.pipeline_mode<synchronous>, transform_indices = @transform_3, window_bounds = array<i64: 128, 10>}, {pipeline_mode = #tpu.pipeline_mode<synchronous>, transform_indices = @transform_4, window_bounds = array<i64: 1, 10>}, {transform_indices = @transform_5, window_bounds = array<i64: 8, 10>}]} {
    %c0 = arith.constant 0 : index
    %c0_0 = arith.constant 0 : index
    %0 = vector.load %arg1[%c0, %c0_0] : memref<8x32xf32, #tpu.memory_space<vmem>>, vector<8x32xf32>
    %c0_1 = arith.constant 0 : index
    %c0_2 = arith.constant 0 : index
    %1 = vector.load %arg2[%c0_1, %c0_2] : memref<32x128xf32, #tpu.memory_space<vmem>>, vector<32x128xf32>
    %cst = arith.constant dense<0.000000e+00> : vector<8x128xf32>
    %2 = tpu.matmul %0, %1, %cst {dimension_numbers = #tpu.dot_dimension_numbers<[1], [0], [0], [1], [0, 0, 1, 1], [], []>} : vector<8x32xf32>, vector<32x128xf32>, vector<8x128xf32> -> vector<8x128xf32>
    %c0_3 = arith.constant 0 : index
    %c0_4 = arith.constant 0 : index
    %3 = vector.load %arg3[%c0_3, %c0_4] : memref<1x128xf32, #tpu.memory_space<vmem>>, vector<1x128xf32>
    %4 = vector.broadcast %3 : vector<1x128xf32> to vector<8x128xf32>
    %5 = arith.addf %2, %4 : vector<8x128xf32>
    %cst_5 = arith.constant 0.000000e+00 : f32
    %6 = vector.broadcast %cst_5 : f32 to vector<8x128xf32>
    %7 = arith.maximumf %5, %6 : vector<8x128xf32>
    %c0_6 = arith.constant 0 : index
    %c0_7 = arith.constant 0 : index
    %8 = vector.load %arg4[%c0_6, %c0_7] : memref<128x10xf32, #tpu.memory_space<vmem>>, vector<128x10xf32>
    %cst_8 = arith.constant dense<0.000000e+00> : vector<8x10xf32>
    %9 = tpu.matmul %7, %8, %cst_8 {dimension_numbers = #tpu.dot_dimension_numbers<[1], [0], [0], [1], [0, 0, 1, 1], [], []>} : vector<8x128xf32>, vector<128x10xf32>, vector<8x10xf32> -> vector<8x10xf32>
    %c0_9 = arith.constant 0 : index
    %c0_10 = arith.constant 0 : index
    %10 = vector.load %arg5[%c0_9, %c0_10] : memref<1x10xf32, #tpu.memory_space<vmem>>, vector<1x10xf32>
    %11 = vector.broadcast %10 : vector<1x10xf32> to vector<8x10xf32>
    %12 = arith.addf %9, %11 : vector<8x10xf32>
    %c0_11 = arith.constant 0 : index
    %c0_12 = arith.constant 0 : index
    %13 = vector.load %arg6[%c0_11, %c0_12] : memref<8x10xf32, #tpu.memory_space<vmem>>, vector<8x10xf32>
    tpu.vector_store %arg6[%c0_11, %c0_12], %12 {strides = array<i32>} : memref<8x10xf32, #tpu.memory_space<vmem>>, vector<8x10xf32>,
    return
  }
  func.func @transform_0(%arg0: i32) -> (i32, i32) {
    %c0_i32 = arith.constant 0 : i32
    %c0_i32_0 = arith.constant 0 : i32
    return %arg0, %c0_i32 : i32, i32
  }
  func.func @transform_1(%arg0: i32) -> (i32, i32) {
    %c0_i32 = arith.constant 0 : i32
    %c0_i32_0 = arith.constant 0 : i32
    %c0_i32_1 = arith.constant 0 : i32
    return %c0_i32, %c0_i32_0 : i32, i32
  }
  func.func @transform_2(%arg0: i32) -> (i32, i32) {
    %c0_i32 = arith.constant 0 : i32
    %c0_i32_0 = arith.constant 0 : i32
    %c0_i32_1 = arith.constant 0 : i32
    return %c0_i32, %c0_i32_0 : i32, i32
  }
  func.func @transform_3(%arg0: i32) -> (i32, i32) {
    %c0_i32 = arith.constant 0 : i32
    %c0_i32_0 = arith.constant 0 : i32
    %c0_i32_1 = arith.constant 0 : i32
    return %c0_i32, %c0_i32_0 : i32, i32
  }
  func.func @transform_4(%arg0: i32) -> (i32, i32) {
    %c0_i32 = arith.constant 0 : i32
    %c0_i32_0 = arith.constant 0 : i32
    %c0_i32_1 = arith.constant 0 : i32
    return %c0_i32, %c0_i32_0 : i32, i32
  }
  func.func @transform_5(%arg0: i32) -> (i32, i32) {
    %c0_i32 = arith.constant 0 : i32
    %c0_i32_0 = arith.constant 0 : i32
    return %arg0, %c0_i32 : i32, i32
  }
}

</mosaic_0001>

<llo_original>
// kernel: tpu_custom_call.1
$region0: #{tpu_custom_call.1}
  #allocation0 [shape = 'u32[]', space=smem, size = 0x4, offset = 0x4, fixed_abs, tag = 'smem constant byte address 0x4 - core index']
  #allocation1 [shape = 'u32[72,128]{1,0:T(1,128)}', space=vmem, size = 0x9000, scoped, tag = 'internal scratch']
  %s0 = inlined_call_operand.vmem [shape: f32[8,32], index: 0, kind: input, shape index: {}]
  %s1 = inlined_call_operand.vmem [shape: f32[32,128], index: 1, kind: input, shape index: {}]
  %s2 = inlined_call_operand.vmem [shape: f32[1,128], index: 2, kind: input, shape index: {}]
  %s3 = inlined_call_operand.vmem [shape: f32[128,10], index: 3, kind: input, shape index: {}]
  %s4 = inlined_call_operand.vmem [shape: f32[1,10], index: 4, kind: input, shape index: {}]
  %s5 = inlined_call_operand.hbm [shape: f32[8,10], index: 5, kind: output, shape index: {}]
  %s6 = sld [smem:[#allocation0]]
  $region30: #{tpu_custom_call.1} parent=0
    _
  %s8 = ssub.s32 1, %s6
  %s9 = scalar_select 0, %s8, %s6
  $region1: #{tpu_custom_call.1} parent=0
    #allocation2 [shape = 'u8[4096]{0}', space=vmem, size = 0x1000, scoped, tag = 'output window, operand 0, single buffered']
    #allocation3 [shape = 's32[1]{0}', space=sflag, size = 0x4, scoped, tag = 'scoped memory for tpu_custom_call.1']
    %10 = vsyncpa [#allocation3], 0
    // Predicated region
    $region2: #{tpu_custom_call.1} parent=1 // pred_check
      _
    $region3: #{tpu_custom_call.1} parent=1 // pred_check_branch
      %12 = sbr.rel (0) target = $region5
    $region4: #{tpu_custom_call.1} parent=1 // pred_region
      _
    $region5: #{tpu_custom_call.1} parent=1 // pred_fallthru
      _
    // Predicated region
    $region6: #{tpu_custom_call.1} parent=1 // pred_check
      _
    $region7: #{tpu_custom_call.1} parent=1 // pred_check_branch
      %14 = sbr.rel (0) target = $region9
    $region8: #{tpu_custom_call.1} parent=1 // pred_region
      _
    $region9: #{tpu_custom_call.1} parent=1 // pred_fallthru
      _
    // Predicated region
    $region10: #{tpu_custom_call.1} parent=1 // pred_check
      _
    $region11: #{tpu_custom_call.1} parent=1 // pred_check_branch
      %16 = sbr.rel (0) target = $region13
    $region12: #{tpu_custom_call.1} parent=1 // pred_region
      _
    $region13: #{tpu_custom_call.1} parent=1 // pred_fallthru
      _
    // Predicated region
    $region14: #{tpu_custom_call.1} parent=1 // pred_check
      _
    $region15: #{tpu_custom_call.1} parent=1 // pred_check_branch
      %18 = sbr.rel (0) target = $region17
    $region16: #{tpu_custom_call.1} parent=1 // pred_region
      _
    $region17: #{tpu_custom_call.1} parent=1 // pred_fallthru
      _
    // Predicated region
    $region18: #{tpu_custom_call.1} parent=1 // pred_check
      _
    $region19: #{tpu_custom_call.1} parent=1 // pred_check_branch
      %20 = sbr.rel (0) target = $region21
    $region20: #{tpu_custom_call.1} parent=1 // pred_region
      _
    $region21: #{tpu_custom_call.1} parent=1 // pred_fallthru
      _
    %v21 = vld [vmem:[%s0] sm:$0xff]
    %v22 = vld [vmem:[%s1] sm:$0xff]
    %v23 = vld [vmem:[%s1 + $0x8] sm:$0xff]
    %v24 = vld [vmem:[%s1 + $0x10] sm:$0xff]
    %v25 = vld [vmem:[%s1 + $0x18] sm:$0xff]
    %v26 = vld [vmem:[%s2] sm:$0x1]
    %v28 = vperm.slane %v26, 0
    %vm30 = vcmask 261120
    %v32 = vsel %vm30, %v21, 0
    %34 = vmatpush.msra.mxu0 0.0
    %35 = vmatpush.msra.mxu0 0.0
    %36 = vmatpush.msra.mxu0 0.0
    %37 = vmatpush.msra.mxu0 0.0
    %38 = vmatpush.msra.mxu0 0.0
    %39 = vmatpush.msra.mxu0 0.0
    %40 = vmatpush.msra.mxu0 0.0
    %41 = vmatpush.msra.mxu0 0.0
    %42 = vmatpush.msra.mxu0 0.0
    %43 = vmatpush.msra.mxu0 0.0
    %44 = vmatpush.msra.mxu0 0.0
    %45 = vmatpush.msra.mxu0 0.0
    %46 = vmatpush.msra.mxu0 %v25
    %47 = vmatpush.msra.mxu0 %v24
    %48 = vmatpush.msra.mxu0 %v23
    %49 = vmatpush.msra.mxu0 %v22
    %50 = vmatmul.f32.gmra.mxu0 %v32
    %v51 = vpop.f32.mrf.mxu0
    %v52 = vadd.f32 %v28, %v51
    %53 = vdwg.mxu0
    %v54 = vmax.f32 %v52, 0.0
    %v55 = vld [vmem:[%s3] sm:$0xff]
    %v56 = vld [vmem:[%s3 + $0x8] sm:$0xff]
    %v57 = vld [vmem:[%s3 + $0x10] sm:$0xff]
    %v58 = vld [vmem:[%s3 + $0x18] sm:$0xff]
    %v59 = vld [vmem:[%s3 + $0x20] sm:$0xff]
    %v60 = vld [vmem:[%s3 + $0x28] sm:$0xff]
    %v61 = vld [vmem:[%s3 + $0x30] sm:$0xff]
    %v62 = vld [vmem:[%s3 + $0x38] sm:$0xff]
    %v63 = vld [vmem:[%s3 + $0x40] sm:$0xff]
    %v64 = vld [vmem:[%s3 + $0x48] sm:$0xff]
    %v65 = vld [vmem:[%s3 + $0x50] sm:$0xff]
    %v66 = vld [vmem:[%s3 + $0x58] sm:$0xff]
    %v67 = vld [vmem:[%s3 + $0x60] sm:$0xff]
    %v68 = vld [vmem:[%s3 + $0x68] sm:$0xff]
    %v69 = vld [vmem:[%s3 + $0x70] sm:$0xff]
    %v70 = vld [vmem:[%s3 + $0x78] sm:$0xff]
    %v71 = vld [vmem:[%s4] sm:$0x1]
    %v73 = vperm.slane %v71, 0
    %75 = vmatpush.msra.mxu0 %v70
    %76 = vmatpush.msra.mxu0 %v69
    %77 = vmatpush.msra.mxu0 %v68
    %78 = vmatpush.msra.mxu0 %v67
    %79 = vmatpush.msra.mxu0 %v66
    %80 = vmatpush.msra.mxu0 %v65
    %81 = vmatpush.msra.mxu0 %v64
    %82 = vmatpush.msra.mxu0 %v63
    %83 = vmatpush.msra.mxu0 %v62
    %84 = vmatpush.msra.mxu0 %v61
    %85 = vmatpush.msra.mxu0 %v60
    %86 = vmatpush.msra.mxu0 %v59
    %87 = vmatpush.msra.mxu0 %v58
    %88 = vmatpush.msra.mxu0 %v57
    %89 = vmatpush.msra.mxu0 %v56
    %90 = vmatpush.msra.mxu0 %v55
    %91 = vmatmul.f32.gmra.mxu0 %v54
    %v92 = vpop.f32.mrf.mxu0
    %v93 = vadd.f32 %v73, %v92
    %94 = vdwg.mxu0
    %vm95 = vcmask 80896
    %96 = vst.msk [vmem:[#allocation2] sm:$0xff] %vm95, %v93
    // Predicated region
    $region22: #{tpu_custom_call.1} parent=1 // pred_check
      _
    $region23: #{tpu_custom_call.1} parent=1 // pred_check_branch
      %98 = sbr.rel (0) target = $region25
    $region24: #{tpu_custom_call.1} parent=1 // pred_region
      %100 = vsyncadd [#allocation3], 0
      %s102 = sshll.u32 [#allocation2], 4
      %s103 = int_to_ptr.vmem [resolvable:$true] %s102
      %s104 = sshll.u32 %s5, 4
      %s105 = int_to_ptr.hbm [resolvable:$true] %s104
      %107 = dma.vmem_to_hbm [thread:$0]  %s103, 128, %s105, [#allocation3]
    $region25: #{tpu_custom_call.1} parent=1 // pred_fallthru
      _
    // Predicated region
    $region26: #{tpu_custom_call.1} parent=1 // pred_check
      _
    $region27: #{tpu_custom_call.1} parent=1 // pred_check_branch
      %109 = sbr.rel (0) target = $region29
    $region28: #{tpu_custom_call.1} parent=1 // pred_region
      %111 = dma.done [#allocation3], 128
    $region29: #{tpu_custom_call.1} parent=1 // pred_fallthru
      _
    %112 = vsyncpa [#allocation3], 1

</llo_original>
